<compile_context>
chip_gen: v5e
topology: v5e:2x2
jax: 0.10.0
libtpu: 0.0.40
codegen_flags: <defaults>
</compile_context>

<pallas_src>
import functools

import numpy as np
import jax
import jax.numpy as jnp
from jax.experimental import pallas as pl
from jax.experimental.pallas import tpu as pltpu

CLAMP_MIN = 1e-12
CLAMP_MAX = 1e12


def _round_up(x, m):
    return (x + m - 1) // m * m


def center_loss_forward(x, centers, labels, *, tf_max=None,
                        vmem_budget_bytes=16 * 1024 * 1024):
    """Fused CenterLoss forward.

    x:       (B, F) float32 features
    centers: (C, F) float32 class centers (the nn.Parameter)
    labels:  (B, C) float32 one/multi-hot labels
    returns (loss: scalar, inlier_dist: (B,))
    """
    B, F = x.shape
    C, F2 = centers.shape
    assert F2 == F, (centers.shape, x.shape)
    assert labels.shape == (B, C), labels.shape

    F_aligned = _round_up(F, 128)

    # VMEM-budget-driven, 128-aligned feature tile.  The double-buffered x /
    # centers input tiles dominate the footprint; labels, the two tiny outputs
    # and the (B, 1) scratch are fixed-size.
    bytes_per_col = 4 * (2 * B + 2 * C)
    tf = max(128, (vmem_budget_bytes // bytes_per_col) // 128 * 128)
    if tf_max is not None:
        tf = min(tf, max(128, (tf_max // 128) * 128))   # enforce 128 alignment

    # ------------------------------------------------------------------
    # Fast path: the whole feature dim fits in one VMEM block -> no grid,
    # no scratch, no padding, no masking.  (Block == full array dims, so the
    # (8,128) divisibility rule does not apply.)
    # ------------------------------------------------------------------
    if tf >= F_aligned:
        def kernel(x_ref, c_ref, lab_ref, loss_ref, inlier_ref):
            xt = x_ref[...]                       # (B, F)
            ct = c_ref[...]                       # (C, F)
            lab = lab_ref[...]                    # (B, C)
            # clamp per (b, c, f) element BEFORE summing over classes (torch order);
            # summing over f per class then over classes is the same total.
            row = jnp.zeros((B, 1), jnp.float32)
            for c in range(C):                    # static unroll, C is small
                d = xt - ct[c:c + 1, :]
                w = jnp.clip((d * d) * lab[:, c:c + 1], CLAMP_MIN, CLAMP_MAX)
                row = row + jnp.sum(w, axis=1, keepdims=True)
            inlier = row * (1.0 / F)
            inlier_ref[...] = inlier
            loss_ref[...] = jnp.sum(inlier, axis=0, keepdims=True) * (1.0 / B)

        loss, inlier = pl.pallas_call(
            kernel,
            out_shape=(jax.ShapeDtypeStruct((1, 1), jnp.float32),
                       jax.ShapeDtypeStruct((B, 1), jnp.float32)),
        )(x, centers, labels)
        return loss[0, 0], inlier[:, 0]

    # ------------------------------------------------------------------
    # Large-F fallback: tile the feature dim ("arbitrary" reduction axis),
    # carry a (B, 1) running row-sum, mask padded lanes only on the last step.
    # ------------------------------------------------------------------
    tf = min(tf, F_aligned)
    Fp = _round_up(F, tf)
    n_steps = Fp // tf
    if Fp != F:
        x = jnp.pad(x, ((0, 0), (0, Fp - F)))
        centers = jnp.pad(centers, ((0, 0), (0, Fp - F)))

    def kernel(x_ref, c_ref, lab_ref, loss_ref, inlier_ref, acc_ref):
        k = pl.program_id(0)
        last = pl.num_programs(0) - 1

        @pl.when(k == 0)
        def _():
            acc_ref[...] = jnp.zeros_like(acc_ref)

        xt = x_ref[...]                            # (B, tf)
        ct = c_ref[...]                            # (C, tf)
        lab = lab_ref[...]                         # (B, C)

        s = None
        for c in range(C):                         # static unroll
            d = xt - ct[c:c + 1, :]
            w = jnp.clip((d * d) * lab[:, c:c + 1], CLAMP_MIN, CLAMP_MAX)
            s = w if s is None else s + w

        @pl.when(k != last)
        def _():
            acc_ref[...] += jnp.sum(s, axis=1, keepdims=True)

        @pl.when(k == last)
        def _():
            st = s
            if Fp != F:
                # Only the last tile contains zero-padded lanes (clamp floor 1e-12).
                valid = F - (n_steps - 1) * tf     # static Python int
                col = jax.lax.broadcasted_iota(jnp.int32, (B, tf), 1)
                st = jnp.where(col < valid, st, 0.0)
            total = acc_ref[...] + jnp.sum(st, axis=1, keepdims=True)
            inlier = total * (1.0 / F)             # mean over logical F, not Fp
            inlier_ref[...] = inlier
            loss_ref[...] = jnp.sum(inlier, axis=0, keepdims=True) * (1.0 / B)

    loss, inlier = pl.pallas_call(
        kernel,
        out_shape=(jax.ShapeDtypeStruct((1, 1), jnp.float32),
                   jax.ShapeDtypeStruct((B, 1), jnp.float32)),
        grid=(n_steps,),
        in_specs=[
            pl.BlockSpec((B, tf), lambda k: (0, k)),
            pl.BlockSpec((C, tf), lambda k: (0, k)),
            pl.BlockSpec((B, C), lambda k: (0, 0)),
        ],
        out_specs=(
            pl.BlockSpec((1, 1), lambda k: (0, 0)),
            pl.BlockSpec((B, 1), lambda k: (0, 0)),
        ),
        scratch_shapes=[pltpu.VMEM((B, 1), jnp.float32)],
        compiler_params=pltpu.CompilerParams(
            dimension_semantics=("arbitrary",)),   # feature axis is a reduction
    )(x, centers, labels)
    return loss[0, 0], inlier[:, 0]


def center_loss_reference(x, centers, labels):
    """Pure-JAX reference, literal transcription of the PyTorch forward."""
    dist = (x[:, None, :] - centers[None, :, :]) ** 2
    inlier = jnp.clip(dist * labels[:, :, None], CLAMP_MIN, CLAMP_MAX).sum(axis=1)
    inlier = inlier.mean(axis=1)
    return inlier.mean(), inlier


if __name__ == "__main__":
    # exp10 context: 6 machine sections (one-hot labels), 2096-dim concatenated features.
    B, C, F = 8, 6, 2096
    key = jax.random.PRNGKey(0)
    kx, kc, kl = jax.random.split(key, 3)
    x = jax.random.normal(kx, (B, F), jnp.float32)
    centers = jax.random.normal(kc, (C, F), jnp.float32)      # torch.randn init
    labels = jax.nn.one_hot(
        jax.random.randint(kl, (B,), 0, C, dtype=jnp.int32), C, dtype=jnp.float32)

    ref_loss, ref_inlier = center_loss_reference(x, centers, labels)

    # Fast path: whole feature dim resident in one VMEM block (no grid).
    loss, inlier = jax.jit(center_loss_forward)(x, centers, labels)
    jax.block_until_ready((loss, inlier))
    assert loss.shape == (), loss.shape
    assert inlier.shape == (B,), inlier.shape
    np.testing.assert_allclose(np.asarray(loss), np.asarray(ref_loss), rtol=1e-5, atol=1e-6)
    np.testing.assert_allclose(np.asarray(inlier), np.asarray(ref_inlier), rtol=1e-5, atol=1e-6)
    assert bool(jnp.isfinite(loss)), "non-finite loss"

    # Also exercise the large-F tiled fallback (forced small, 128-aligned tile).
    loss_t, inlier_t = jax.jit(
        functools.partial(center_loss_forward, tf_max=512))(x, centers, labels)
    jax.block_until_ready((loss_t, inlier_t))
    np.testing.assert_allclose(np.asarray(loss_t), np.asarray(ref_loss), rtol=1e-5, atol=1e-6)
    np.testing.assert_allclose(np.asarray(inlier_t), np.asarray(ref_inlier), rtol=1e-5, atol=1e-6)

    print("KERNEL_OK")
</pallas_src>

<mosaic_0001>
module attributes {stable_mosaic.version = 11 : i64} {
  func.func @kernel(%arg0: memref<8x2096xf32, #tpu.memory_space<vmem>>, %arg1: memref<6x2096xf32, #tpu.memory_space<vmem>>, %arg2: memref<8x6xf32, #tpu.memory_space<vmem>>, %arg3: memref<1x1xf32, #tpu.memory_space<vmem>>, %arg4: memref<8x1xf32, #tpu.memory_space<vmem>>) attributes {dimension_semantics = [], scalar_prefetch = 0 : i64, scratch_operands = 0 : i64, tpu.core_type = #tpu.core_type<tc>} {
    %c0 = arith.constant 0 : index
    %c0_0 = arith.constant 0 : index
    %0 = vector.load %arg0[%c0, %c0_0] : memref<8x2096xf32, #tpu.memory_space<vmem>>, vector<8x2096xf32>
    %c0_1 = arith.constant 0 : index
    %c0_2 = arith.constant 0 : index
    %1 = vector.load %arg1[%c0_1, %c0_2] : memref<6x2096xf32, #tpu.memory_space<vmem>>, vector<6x2096xf32>
    %c0_3 = arith.constant 0 : index
    %c0_4 = arith.constant 0 : index
    %2 = vector.load %arg2[%c0_3, %c0_4] : memref<8x6xf32, #tpu.memory_space<vmem>>, vector<8x6xf32>
    %cst = arith.constant 0.000000e+00 : f32
    %3 = vector.broadcast %cst : f32 to vector<8x1xf32>
    %4 = vector.extract_strided_slice %1 {offsets = [0, 0], sizes = [1, 2096], strides = [1, 1]} : vector<6x2096xf32> to vector<1x2096xf32>
    %5 = vector.broadcast %4 : vector<1x2096xf32> to vector<8x2096xf32>
    %6 = arith.subf %0, %5 : vector<8x2096xf32>
    %7 = arith.mulf %6, %6 : vector<8x2096xf32>
    %8 = vector.extract_strided_slice %2 {offsets = [0, 0], sizes = [8, 1], strides = [1, 1]} : vector<8x6xf32> to vector<8x1xf32>
    %9 = vector.broadcast %8 : vector<8x1xf32> to vector<8x2096xf32>
    %10 = arith.mulf %7, %9 : vector<8x2096xf32>
    %cst_5 = arith.constant 9.99999996E-13 : f32
    %cst_6 = arith.constant 9.99999995E+11 : f32
    %11 = vector.broadcast %cst_5 : f32 to vector<8x2096xf32>
    %12 = arith.maximumf %11, %10 : vector<8x2096xf32>
    %13 = vector.broadcast %cst_6 : f32 to vector<8x2096xf32>
    %14 = arith.minimumf %13, %12 : vector<8x2096xf32>
    %cst_7 = arith.constant dense<0.000000e+00> : vector<8xf32>
    %15 = vector.multi_reduction <add>, %14, %cst_7 [1] : vector<8x2096xf32> to vector<8xf32>
    %16 = vector.shape_cast %15 : vector<8xf32> to vector<8x1xf32>
    %17 = arith.addf %3, %16 : vector<8x1xf32>
    %18 = vector.extract_strided_slice %1 {offsets = [1, 0], sizes = [1, 2096], strides = [1, 1]} : vector<6x2096xf32> to vector<1x2096xf32>
    %19 = vector.broadcast %18 : vector<1x2096xf32> to vector<8x2096xf32>
    %20 = arith.subf %0, %19 : vector<8x2096xf32>
    %21 = arith.mulf %20, %20 : vector<8x2096xf32>
    %22 = vector.extract_strided_slice %2 {offsets = [0, 1], sizes = [8, 1], strides = [1, 1]} : vector<8x6xf32> to vector<8x1xf32>
    %23 = vector.broadcast %22 : vector<8x1xf32> to vector<8x2096xf32>
    %24 = arith.mulf %21, %23 : vector<8x2096xf32>
    %cst_8 = arith.constant 9.99999996E-13 : f32
    %cst_9 = arith.constant 9.99999995E+11 : f32
    %25 = vector.broadcast %cst_8 : f32 to vector<8x2096xf32>
    %26 = arith.maximumf %25, %24 : vector<8x2096xf32>
    %27 = vector.broadcast %cst_9 : f32 to vector<8x2096xf32>
    %28 = arith.minimumf %27, %26 : vector<8x2096xf32>
    %cst_10 = arith.constant dense<0.000000e+00> : vector<8xf32>
    %29 = vector.multi_reduction <add>, %28, %cst_10 [1] : vector<8x2096xf32> to vector<8xf32>
    %30 = vector.shape_cast %29 : vector<8xf32> to vector<8x1xf32>
    %31 = arith.addf %17, %30 : vector<8x1xf32>
    %32 = vector.extract_strided_slice %1 {offsets = [2, 0], sizes = [1, 2096], strides = [1, 1]} : vector<6x2096xf32> to vector<1x2096xf32>
    %33 = vector.broadcast %32 : vector<1x2096xf32> to vector<8x2096xf32>
    %34 = arith.subf %0, %33 : vector<8x2096xf32>
    %35 = arith.mulf %34, %34 : vector<8x2096xf32>
    %36 = vector.extract_strided_slice %2 {offsets = [0, 2], sizes = [8, 1], strides = [1, 1]} : vector<8x6xf32> to vector<8x1xf32>
    %37 = vector.broadcast %36 : vector<8x1xf32> to vector<8x2096xf32>
    %38 = arith.mulf %35, %37 : vector<8x2096xf32>
    %cst_11 = arith.constant 9.99999996E-13 : f32
    %cst_12 = arith.constant 9.99999995E+11 : f32
    %39 = vector.broadcast %cst_11 : f32 to vector<8x2096xf32>
    %40 = arith.maximumf %39, %38 : vector<8x2096xf32>
    %41 = vector.broadcast %cst_12 : f32 to vector<8x2096xf32>
    %42 = arith.minimumf %41, %40 : vector<8x2096xf32>
    %cst_13 = arith.constant dense<0.000000e+00> : vector<8xf32>
    %43 = vector.multi_reduction <add>, %42, %cst_13 [1] : vector<8x2096xf32> to vector<8xf32>
    %44 = vector.shape_cast %43 : vector<8xf32> to vector<8x1xf32>
    %45 = arith.addf %31, %44 : vector<8x1xf32>
    %46 = vector.extract_strided_slice %1 {offsets = [3, 0], sizes = [1, 2096], strides = [1, 1]} : vector<6x2096xf32> to vector<1x2096xf32>
    %47 = vector.broadcast %46 : vector<1x2096xf32> to vector<8x2096xf32>
    %48 = arith.subf %0, %47 : vector<8x2096xf32>
    %49 = arith.mulf %48, %48 : vector<8x2096xf32>
    %50 = vector.extract_strided_slice %2 {offsets = [0, 3], sizes = [8, 1], strides = [1, 1]} : vector<8x6xf32> to vector<8x1xf32>
    %51 = vector.broadcast %50 : vector<8x1xf32> to vector<8x2096xf32>
    %52 = arith.mulf %49, %51 : vector<8x2096xf32>
    %cst_14 = arith.constant 9.99999996E-13 : f32
    %cst_15 = arith.constant 9.99999995E+11 : f32
    %53 = vector.broadcast %cst_14 : f32 to vector<8x2096xf32>
    %54 = arith.maximumf %53, %52 : vector<8x2096xf32>
    %55 = vector.broadcast %cst_15 : f32 to vector<8x2096xf32>
    %56 = arith.minimumf %55, %54 : vector<8x2096xf32>
    %cst_16 = arith.constant dense<0.000000e+00> : vector<8xf32>
    %57 = vector.multi_reduction <add>, %56, %cst_16 [1] : vector<8x2096xf32> to vector<8xf32>
    %58 = vector.shape_cast %57 : vector<8xf32> to vector<8x1xf32>
    %59 = arith.addf %45, %58 : vector<8x1xf32>
    %60 = vector.extract_strided_slice %1 {offsets = [4, 0], sizes = [1, 2096], strides = [1, 1]} : vector<6x2096xf32> to vector<1x2096xf32>
    %61 = vector.broadcast %60 : vector<1x2096xf32> to vector<8x2096xf32>
    %62 = arith.subf %0, %61 : vector<8x2096xf32>
    %63 = arith.mulf %62, %62 : vector<8x2096xf32>
    %64 = vector.extract_strided_slice %2 {offsets = [0, 4], sizes = [8, 1], strides = [1, 1]} : vector<8x6xf32> to vector<8x1xf32>
    %65 = vector.broadcast %64 : vector<8x1xf32> to vector<8x2096xf32>
    %66 = arith.mulf %63, %65 : vector<8x2096xf32>
    %cst_17 = arith.constant 9.99999996E-13 : f32
    %cst_18 = arith.constant 9.99999995E+11 : f32
    %67 = vector.broadcast %cst_17 : f32 to vector<8x2096xf32>
    %68 = arith.maximumf %67, %66 : vector<8x2096xf32>
    %69 = vector.broadcast %cst_18 : f32 to vector<8x2096xf32>
    %70 = arith.minimumf %69, %68 : vector<8x2096xf32>
    %cst_19 = arith.constant dense<0.000000e+00> : vector<8xf32>
    %71 = vector.multi_reduction <add>, %70, %cst_19 [1] : vector<8x2096xf32> to vector<8xf32>
    %72 = vector.shape_cast %71 : vector<8xf32> to vector<8x1xf32>
    %73 = arith.addf %59, %72 : vector<8x1xf32>
    %74 = vector.extract_strided_slice %1 {offsets = [5, 0], sizes = [1, 2096], strides = [1, 1]} : vector<6x2096xf32> to vector<1x2096xf32>
    %75 = vector.broadcast %74 : vector<1x2096xf32> to vector<8x2096xf32>
    %76 = arith.subf %0, %75 : vector<8x2096xf32>
    %77 = arith.mulf %76, %76 : vector<8x2096xf32>
    %78 = vector.extract_strided_slice %2 {offsets = [0, 5], sizes = [8, 1], strides = [1, 1]} : vector<8x6xf32> to vector<8x1xf32>
    %79 = vector.broadcast %78 : vector<8x1xf32> to vector<8x2096xf32>
    %80 = arith.mulf %77, %79 : vector<8x2096xf32>
    %cst_20 = arith.constant 9.99999996E-13 : f32
    %cst_21 = arith.constant 9.99999995E+11 : f32
    %81 = vector.broadcast %cst_20 : f32 to vector<8x2096xf32>
    %82 = arith.maximumf %81, %80 : vector<8x2096xf32>
    %83 = vector.broadcast %cst_21 : f32 to vector<8x2096xf32>
    %84 = arith.minimumf %83, %82 : vector<8x2096xf32>
    %cst_22 = arith.constant dense<0.000000e+00> : vector<8xf32>
    %85 = vector.multi_reduction <add>, %84, %cst_22 [1] : vector<8x2096xf32> to vector<8xf32>
    %86 = vector.shape_cast %85 : vector<8xf32> to vector<8x1xf32>
    %87 = arith.addf %73, %86 : vector<8x1xf32>
    %cst_23 = arith.constant 4.77099238E-4 : f32
    %88 = vector.broadcast %cst_23 : f32 to vector<8x1xf32>
    %89 = arith.mulf %87, %88 : vector<8x1xf32>
    %c0_24 = arith.constant 0 : index
    %c0_25 = arith.constant 0 : index
    %90 = vector.load %arg4[%c0_24, %c0_25] : memref<8x1xf32, #tpu.memory_space<vmem>>, vector<8x1xf32>
    tpu.vector_store %arg4[%c0_24, %c0_25], %89 {strides = array<i32>} : memref<8x1xf32, #tpu.memory_space<vmem>>, vector<8x1xf32>,
    %cst_26 = arith.constant dense<0.000000e+00> : vector<1xf32>
    %91 = vector.multi_reduction <add>, %89, %cst_26 [0] : vector<8x1xf32> to vector<1xf32>
    %92 = vector.shape_cast %91 : vector<1xf32> to vector<1x1xf32>
    %cst_27 = arith.constant 1.250000e-01 : f32
    %93 = vector.broadcast %cst_27 : f32 to vector<1x1xf32>
    %94 = arith.mulf %92, %93 : vector<1x1xf32>
    %c0_28 = arith.constant 0 : index
    %c0_29 = arith.constant 0 : index
    %95 = vector.load %arg3[%c0_28, %c0_29] : memref<1x1xf32, #tpu.memory_space<vmem>>, vector<1x1xf32>
    tpu.vector_store %arg3[%c0_28, %c0_29], %94 {strides = array<i32>} : memref<1x1xf32, #tpu.memory_space<vmem>>, vector<1x1xf32>,
    return
  }
}

</mosaic_0001>

<llo_original>
// kernel: center_loss_forward.1
$region0: #{center_loss_forward.1}
  #allocation0 [shape = 'u32[]', space=smem, size = 0x4, offset = 0x4, fixed_abs, tag = 'smem constant byte address 0x4 - core index']
  #allocation1 [shape = 'u32[72,128]{1,0:T(1,128)}', space=vmem, size = 0x9000, scoped, tag = 'internal scratch']
  %s0 = inlined_call_operand.hbm [shape: f32[8,2096], index: 0, kind: input, shape index: {}]
  %s1 = inlined_call_operand.hbm [shape: f32[6,2096], index: 1, kind: input, shape index: {}]
  %s2 = inlined_call_operand.hbm [shape: f32[8,6], index: 2, kind: input, shape index: {}]
  %s3 = inlined_call_operand.hbm [shape: f32[1,1], index: 3, kind: output, shape index: {0}]
  %s4 = inlined_call_operand.vmem [shape: f32[8,1], index: 4, kind: output, shape index: {1}]
  %5 = xla_tuple %s3, %s4
  %s6 = sld [smem:[#allocation0]]
  $region42: #{center_loss_forward.1} parent=0
    _
  %s8 = ssub.s32 1, %s6
  %s9 = scalar_select 0, %s8, %s6
  $region1: #{center_loss_forward.1} parent=0
    #allocation2 [shape = 'u8[69632]{0}', space=vmem, size = 0x11000, scoped, tag = 'input window, operand 0, single buffered']
    #allocation3 [shape = 's32[1]{0}', space=sflag, size = 0x4, scoped, tag = 'scoped memory for center_loss_forward.1']
    #allocation4 [shape = 's32[1]{0}', space=sflag, size = 0x4, scoped, tag = 'scoped memory for center_loss_forward.1']
    #allocation5 [shape = 'u8[69632]{0}', space=vmem, size = 0x11000, scoped, tag = 'input window, operand 1, single buffered']
    #allocation6 [shape = 's32[1]{0}', space=sflag, size = 0x4, scoped, tag = 'scoped memory for center_loss_forward.1']
    #allocation7 [shape = 'u8[4096]{0}', space=vmem, size = 0x1000, scoped, tag = 'input window, operand 2, single buffered']
    #allocation8 [shape = 'u8[512]{0}', space=vmem, size = 0x400, scoped, tag = 'output window, operand 0, single buffered']
    %10 = vsyncpa [#allocation3], 0
    %11 = vsyncpa [#allocation6], 0
    %12 = vsyncpa [#allocation4], 0
    // Predicated region
    $region2: #{center_loss_forward.1} parent=1 // pred_check
      _
    $region3: #{center_loss_forward.1} parent=1 // pred_check_branch
      %14 = sbr.rel (0) target = $region5
    $region4: #{center_loss_forward.1} parent=1 // pred_region
      %16 = vsyncadd [#allocation3], 0
      %s18 = sshll.u32 %s0, 4
      %s19 = int_to_ptr.hbm [resolvable:$true] %s18
      %s20 = sshll.u32 [#allocation2], 4
      %s21 = int_to_ptr.vmem [resolvable:$true] %s20
      %23 = dma.hbm_to_vmem [thread:$0]  %s19, 2176, %s21, [#allocation3]
    $region5: #{center_loss_forward.1} parent=1 // pred_fallthru
      _
    // Predicated region
    $region6: #{center_loss_forward.1} parent=1 // pred_check
      _
    $region7: #{center_loss_forward.1} parent=1 // pred_check_branch
      %25 = sbr.rel (0) target = $region9
    $region8: #{center_loss_forward.1} parent=1 // pred_region
      %27 = vsyncadd [#allocation6], 0
      %s29 = sshll.u32 %s1, 4
      %s30 = int_to_ptr.hbm [resolvable:$true] %s29
      %s31 = sshll.u32 [#allocation5], 4
      %s32 = int_to_ptr.vmem [resolvable:$true] %s31
      %34 = dma.hbm_to_vmem [thread:$0]  %s30, 2176, %s32, [#allocation6]
    $region9: #{center_loss_forward.1} parent=1 // pred_fallthru
      _
    // Predicated region
    $region10: #{center_loss_forward.1} parent=1 // pred_check
      _
    $region11: #{center_loss_forward.1} parent=1 // pred_check_branch
      %36 = sbr.rel (0) target = $region13
    $region12: #{center_loss_forward.1} parent=1 // pred_region
      %38 = vsyncadd [#allocation6], 0
      %s40 = sshll.u32 %s2, 4
      %s41 = int_to_ptr.hbm [resolvable:$true] %s40
      %s42 = sshll.u32 [#allocation7], 4
      %s43 = int_to_ptr.vmem [resolvable:$true] %s42
      %45 = dma.hbm_to_vmem [thread:$0]  %s41, 128, %s43, [#allocation6]
    $region13: #{center_loss_forward.1} parent=1 // pred_fallthru
      _
    // Predicated region
    $region14: #{center_loss_forward.1} parent=1 // pred_check
      _
    $region15: #{center_loss_forward.1} parent=1 // pred_check_branch
      %47 = sbr.rel (0) target = $region17
    $region16: #{center_loss_forward.1} parent=1 // pred_region
      %49 = dma.done [#allocation3], 2176
    $region17: #{center_loss_forward.1} parent=1 // pred_fallthru
      _
    // Predicated region
    $region18: #{center_loss_forward.1} parent=1 // pred_check
      _
    $region19: #{center_loss_forward.1} parent=1 // pred_check_branch
      %51 = sbr.rel (0) target = $region21
    $region20: #{center_loss_forward.1} parent=1 // pred_region
      %53 = dma.done [#allocation6], 2176
    $region21: #{center_loss_forward.1} parent=1 // pred_fallthru
      _
    // Predicated region
    $region22: #{center_loss_forward.1} parent=1 // pred_check
      _
    $region23: #{center_loss_forward.1} parent=1 // pred_check_branch
      %55 = sbr.rel (0) target = $region25
    $region24: #{center_loss_forward.1} parent=1 // pred_region
      %57 = dma.done [#allocation6], 128
    $region25: #{center_loss_forward.1} parent=1 // pred_fallthru
      _
    %v58 = vld [vmem:[#allocation2] sm:$0xff]
    %v59 = vld [vmem:[#allocation2 + $0x8] sm:$0xff]
    %v60 = vld [vmem:[#allocation2 + $0x10] sm:$0xff]
    %v61 = vld [vmem:[#allocation2 + $0x18] sm:$0xff]
    %v62 = vld [vmem:[#allocation2 + $0x20] sm:$0xff]
    %v63 = vld [vmem:[#allocation2 + $0x28] sm:$0xff]
    %v64 = vld [vmem:[#allocation2 + $0x30] sm:$0xff]
    %v65 = vld [vmem:[#allocation2 + $0x38] sm:$0xff]
    %v66 = vld [vmem:[#allocation2 + $0x40] sm:$0xff]
    %v67 = vld [vmem:[#allocation2 + $0x48] sm:$0xff]
    %v68 = vld [vmem:[#allocation2 + $0x50] sm:$0xff]
    %v69 = vld [vmem:[#allocation2 + $0x58] sm:$0xff]
    %v70 = vld [vmem:[#allocation2 + $0x60] sm:$0xff]
    %v71 = vld [vmem:[#allocation2 + $0x68] sm:$0xff]
    %v72 = vld [vmem:[#allocation2 + $0x70] sm:$0xff]
    %v73 = vld [vmem:[#allocation2 + $0x78] sm:$0xff]
    %v74 = vld [vmem:[#allocation2 + $0x80] sm:$0xff]
    %v75 = vld [vmem:[#allocation5] sm:$0x3f]
    %v76 = vld [vmem:[#allocation5 + $0x8] sm:$0x3f]
    %v77 = vld [vmem:[#allocation5 + $0x10] sm:$0x3f]
    %v78 = vld [vmem:[#allocation5 + $0x18] sm:$0x3f]
    %v79 = vld [vmem:[#allocation5 + $0x20] sm:$0x3f]
    %v80 = vld [vmem:[#allocation5 + $0x28] sm:$0x3f]
    %v81 = vld [vmem:[#allocation5 + $0x30] sm:$0x3f]
    %v82 = vld [vmem:[#allocation5 + $0x38] sm:$0x3f]
    %v83 = vld [vmem:[#allocation5 + $0x40] sm:$0x3f]
    %v84 = vld [vmem:[#allocation5 + $0x48] sm:$0x3f]
    %v85 = vld [vmem:[#allocation5 + $0x50] sm:$0x3f]
    %v86 = vld [vmem:[#allocation5 + $0x58] sm:$0x3f]
    %v87 = vld [vmem:[#allocation5 + $0x60] sm:$0x3f]
    %v88 = vld [vmem:[#allocation5 + $0x68] sm:$0x3f]
    %v89 = vld [vmem:[#allocation5 + $0x70] sm:$0x3f]
    %v90 = vld [vmem:[#allocation5 + $0x78] sm:$0x3f]
    %v91 = vld [vmem:[#allocation5 + $0x80] sm:$0x3f]
    %v92 = vld [vmem:[#allocation7] sm:$0xff]
    %v93 = vperm.slane %v75, 0
    %v94 = vperm.slane %v76, 0
    %v95 = vperm.slane %v77, 0
    %v96 = vperm.slane %v78, 0
    %v97 = vperm.slane %v79, 0
    %v98 = vperm.slane %v80, 0
    %v99 = vperm.slane %v81, 0
    %v100 = vperm.slane %v82, 0
    %v101 = vperm.slane %v83, 0
    %v102 = vperm.slane %v84, 0
    %v103 = vperm.slane %v85, 0
    %v104 = vperm.slane %v86, 0
    %v105 = vperm.slane %v87, 0
    %v106 = vperm.slane %v88, 0
    %v107 = vperm.slane %v89, 0
    %v108 = vperm.slane %v90, 0
    %v109 = vperm.slane %v91, 0
    %v110 = vsub.f32 %v58, %v93
    %v111 = vsub.f32 %v59, %v94
    %v112 = vsub.f32 %v60, %v95
    %v113 = vsub.f32 %v61, %v96
    %v114 = vsub.f32 %v62, %v97
    %v115 = vsub.f32 %v63, %v98
    %v116 = vsub.f32 %v64, %v99
    %v117 = vsub.f32 %v65, %v100
    %v118 = vsub.f32 %v66, %v101
    %v119 = vsub.f32 %v67, %v102
    %v120 = vsub.f32 %v68, %v103
    %v121 = vsub.f32 %v69, %v104
    %v122 = vsub.f32 %v70, %v105
    %v123 = vsub.f32 %v71, %v106
    %v124 = vsub.f32 %v72, %v107
    %v125 = vsub.f32 %v73, %v108
    %v126 = vsub.f32 %v74, %v109
    %v127 = vmul.f32 %v110, %v110
    %v128 = vmul.f32 %v111, %v111
    %v129 = vmul.f32 %v112, %v112
    %v130 = vmul.f32 %v113, %v113
    %v131 = vmul.f32 %v114, %v114
    %v132 = vmul.f32 %v115, %v115
    %v133 = vmul.f32 %v116, %v116
    %v134 = vmul.f32 %v117, %v117
    %v135 = vmul.f32 %v118, %v118
    %v136 = vmul.f32 %v119, %v119
    %v137 = vmul.f32 %v120, %v120
    %v138 = vmul.f32 %v121, %v121
    %v139 = vmul.f32 %v122, %v122
    %v140 = vmul.f32 %v123, %v123
    %v141 = vmul.f32 %v124, %v124
    %v142 = vmul.f32 %v125, %v125
    %v143 = vmul.f32 %v126, %v126
    %145 = vset.pattern.permute.xlu0 0
    %146 = vperm.xlu0 %145, %v92
    %v147 = vpop.permute.xlu0 %146
    %v149 = vmul.f32 %v127, %v147
    %v150 = vmul.f32 %v128, %v147
    %v151 = vmul.f32 %v129, %v147
    %v152 = vmul.f32 %v130, %v147
    %v153 = vmul.f32 %v131, %v147
    %v154 = vmul.f32 %v132, %v147
    %v155 = vmul.f32 %v133, %v147
    %v156 = vmul.f32 %v134, %v147
    %v157 = vmul.f32 %v135, %v147
    %v158 = vmul.f32 %v136, %v147
    %v159 = vmul.f32 %v137, %v147
    %v160 = vmul.f32 %v138, %v147
    %v161 = vmul.f32 %v139, %v147
    %v162 = vmul.f32 %v140, %v147
    %v163 = vmul.f32 %v141, %v147
    %v164 = vmul.f32 %v142, %v147
    %v165 = vmul.f32 %v143, %v147
    %v166 = vmax.f32 %v149, 1e-12
    %v167 = vmax.f32 %v150, 1e-12
    %v168 = vmax.f32 %v151, 1e-12
    %v169 = vmax.f32 %v152, 1e-12
    %v170 = vmax.f32 %v153, 1e-12
    %v171 = vmax.f32 %v154, 1e-12
    %v172 = vmax.f32 %v155, 1e-12
    %v173 = vmax.f32 %v156, 1e-12
    %v174 = vmax.f32 %v157, 1e-12
    %v175 = vmax.f32 %v158, 1e-12
    %v176 = vmax.f32 %v159, 1e-12
    %v177 = vmax.f32 %v160, 1e-12
    %v178 = vmax.f32 %v161, 1e-12
    %v179 = vmax.f32 %v162, 1e-12
    %v180 = vmax.f32 %v163, 1e-12
    %v181 = vmax.f32 %v164, 1e-12
    %v182 = vmax.f32 %v165, 1e-12
    %v183 = vmin.f32 %v166, 1e+12
    %v184 = vmin.f32 %v167, 1e+12
    %v185 = vmin.f32 %v168, 1e+12
    %v186 = vmin.f32 %v169, 1e+12
    %v187 = vmin.f32 %v170, 1e+12
    %v188 = vmin.f32 %v171, 1e+12
    %v189 = vmin.f32 %v172, 1e+12
    %v190 = vmin.f32 %v173, 1e+12
    %v191 = vmin.f32 %v174, 1e+12
    %v192 = vmin.f32 %v175, 1e+12
    %v193 = vmin.f32 %v176, 1e+12
    %v194 = vmin.f32 %v177, 1e+12
    %v195 = vmin.f32 %v178, 1e+12
    %v196 = vmin.f32 %v179, 1e+12
    %v197 = vmin.f32 %v180, 1e+12
    %v198 = vmin.f32 %v181, 1e+12
    %v199 = vmin.f32 %v182, 1e+12
    %v200 = vadd.f32 %v183, %v184
    %v201 = vadd.f32 %v200, %v185
    %v202 = vadd.f32 %v201, %v186
    %v203 = vadd.f32 %v202, %v187
    %v204 = vadd.f32 %v203, %v188
    %v205 = vadd.f32 %v204, %v189
    %v206 = vadd.f32 %v205, %v190
    %v207 = vadd.f32 %v206, %v191
    %v208 = vadd.f32 %v207, %v192
    %v209 = vadd.f32 %v208, %v193
    %v210 = vadd.f32 %v209, %v194
    %v211 = vadd.f32 %v210, %v195
    %v212 = vadd.f32 %v211, %v196
    %v213 = vadd.f32 %v212, %v197
    %v214 = vadd.f32 %v213, %v198
    %vm215 = vcmask 392192
    %v216 = vsel %vm215, %v199, 0.0
    %v217 = vadd.f32 %v214, %v216
    %218 = vadd.xlane.f32.xlu0 %v217
    %v219 = vpop.xlane.xlu0 %218
    %v220 = vadd.f32 %v219, 0.0
    %v221 = vperm.slane %v75, 1
    %v222 = vperm.slane %v76, 1
    %v223 = vperm.slane %v77, 1
    %v224 = vperm.slane %v78, 1
    %v225 = vperm.slane %v79, 1
    %v226 = vperm.slane %v80, 1
    %v227 = vperm.slane %v81, 1
    %v228 = vperm.slane %v82, 1
    %v229 = vperm.slane %v83, 1
    %v230 = vperm.slane %v84, 1
    %v231 = vperm.slane %v85, 1
    %v232 = vperm.slane %v86, 1
    %v233 = vperm.slane %v87, 1
    %v234 = vperm.slane %v88, 1
    %v235 = vperm.slane %v89, 1
    %v236 = vperm.slane %v90, 1
    %v237 = vperm.slane %v91, 1
    %v238 = vsub.f32 %v58, %v221
    %v239 = vsub.f32 %v59, %v222
    %v240 = vsub.f32 %v60, %v223
    %v241 = vsub.f32 %v61, %v224
    %v242 = vsub.f32 %v62, %v225
    %v243 = vsub.f32 %v63, %v226
    %v244 = vsub.f32 %v64, %v227
    %v245 = vsub.f32 %v65, %v228
    %v246 = vsub.f32 %v66, %v229
    %v247 = vsub.f32 %v67, %v230
    %v248 = vsub.f32 %v68, %v231
    %v249 = vsub.f32 %v69, %v232
    %v250 = vsub.f32 %v70, %v233
    %v251 = vsub.f32 %v71, %v234
    %v252 = vsub.f32 %v72, %v235
    %v253 = vsub.f32 %v73, %v236
    %v254 = vsub.f32 %v74, %v237
    %v255 = vmul.f32 %v238, %v238
    %v256 = vmul.f32 %v239, %v239
    %v257 = vmul.f32 %v240, %v240
    %v258 = vmul.f32 %v241, %v241
    %v259 = vmul.f32 %v242, %v242
    %v260 = vmul.f32 %v243, %v243
    %v261 = vmul.f32 %v244, %v244
    %v262 = vmul.f32 %v245, %v245
    %v263 = vmul.f32 %v246, %v246
    %v264 = vmul.f32 %v247, %v247
    %v265 = vmul.f32 %v248, %v248
    %v266 = vmul.f32 %v249, %v249
    %v267 = vmul.f32 %v250, %v250
    %v268 = vmul.f32 %v251, %v251
    %v269 = vmul.f32 %v252, %v252
    %v270 = vmul.f32 %v253, %v253
    %v271 = vmul.f32 %v254, %v254
    %272 = vset.pattern.permute.xlu0 1
    %273 = vperm.xlu0 %272, %v92
    %v274 = vpop.permute.xlu0 %273
    %v276 = vmul.f32 %v255, %v274
    %v277 = vmul.f32 %v256, %v274
    %v278 = vmul.f32 %v257, %v274
    %v279 = vmul.f32 %v258, %v274
    %v280 = vmul.f32 %v259, %v274
    %v281 = vmul.f32 %v260, %v274
    %v282 = vmul.f32 %v261, %v274
    %v283 = vmul.f32 %v262, %v274
    %v284 = vmul.f32 %v263, %v274
    %v285 = vmul.f32 %v264, %v274
    %v286 = vmul.f32 %v265, %v274
    %v287 = vmul.f32 %v266, %v274
    %v288 = vmul.f32 %v267, %v274
    %v289 = vmul.f32 %v268, %v274
    %v290 = vmul.f32 %v269, %v274
    %v291 = vmul.f32 %v270, %v274
    %v292 = vmul.f32 %v271, %v274
    %v293 = vmax.f32 %v276, 1e-12
    %v294 = vmax.f32 %v277, 1e-12
    %v295 = vmax.f32 %v278, 1e-12
    %v296 = vmax.f32 %v279, 1e-12
    %v297 = vmax.f32 %v280, 1e-12
    %v298 = vmax.f32 %v281, 1e-12
    %v299 = vmax.f32 %v282, 1e-12
    %v300 = vmax.f32 %v283, 1e-12
    %v301 = vmax.f32 %v284, 1e-12
    %v302 = vmax.f32 %v285, 1e-12
    %v303 = vmax.f32 %v286, 1e-12
    %v304 = vmax.f32 %v287, 1e-12
    %v305 = vmax.f32 %v288, 1e-12
    %v306 = vmax.f32 %v289, 1e-12
    %v307 = vmax.f32 %v290, 1e-12
    %v308 = vmax.f32 %v291, 1e-12
    %v309 = vmax.f32 %v292, 1e-12
    %v310 = vmin.f32 %v293, 1e+12
    %v311 = vmin.f32 %v294, 1e+12
    %v312 = vmin.f32 %v295, 1e+12
    %v313 = vmin.f32 %v296, 1e+12
    %v314 = vmin.f32 %v297, 1e+12
    %v315 = vmin.f32 %v298, 1e+12
    %v316 = vmin.f32 %v299, 1e+12
    %v317 = vmin.f32 %v300, 1e+12
    %v318 = vmin.f32 %v301, 1e+12
    %v319 = vmin.f32 %v302, 1e+12
    %v320 = vmin.f32 %v303, 1e+12
    %v321 = vmin.f32 %v304, 1e+12
    %v322 = vmin.f32 %v305, 1e+12
    %v323 = vmin.f32 %v306, 1e+12
    %v324 = vmin.f32 %v307, 1e+12
    %v325 = vmin.f32 %v308, 1e+12
    %v326 = vmin.f32 %v309, 1e+12
    %v327 = vadd.f32 %v310, %v311
    %v328 = vadd.f32 %v327, %v312
    %v329 = vadd.f32 %v328, %v313
    %v330 = vadd.f32 %v329, %v314
    %v331 = vadd.f32 %v330, %v315
    %v332 = vadd.f32 %v331, %v316
    %v333 = vadd.f32 %v332, %v317
    %v334 = vadd.f32 %v333, %v318
    %v335 = vadd.f32 %v334, %v319
    %v336 = vadd.f32 %v335, %v320
    %v337 = vadd.f32 %v336, %v321
    %v338 = vadd.f32 %v337, %v322
    %v339 = vadd.f32 %v338, %v323
    %v340 = vadd.f32 %v339, %v324
    %v341 = vadd.f32 %v340, %v325
    %v342 = vsel %vm215, %v326, 0.0
    %v343 = vadd.f32 %v341, %v342
    %344 = vadd.xlane.f32.xlu0 %v343
    %v345 = vpop.xlane.xlu0 %344
    %v346 = vadd.f32 %v220, %v345
    %v347 = vperm.slane %v75, 2
    %v348 = vperm.slane %v76, 2
    %v349 = vperm.slane %v77, 2
    %v350 = vperm.slane %v78, 2
    %v351 = vperm.slane %v79, 2
    %v352 = vperm.slane %v80, 2
    %v353 = vperm.slane %v81, 2
    %v354 = vperm.slane %v82, 2
    %v355 = vperm.slane %v83, 2
    %v356 = vperm.slane %v84, 2
    %v357 = vperm.slane %v85, 2
    %v358 = vperm.slane %v86, 2
    %v359 = vperm.slane %v87, 2
    %v360 = vperm.slane %v88, 2
    %v361 = vperm.slane %v89, 2
    %v362 = vperm.slane %v90, 2
    %v363 = vperm.slane %v91, 2
    %v364 = vsub.f32 %v58, %v347
    %v365 = vsub.f32 %v59, %v348
    %v366 = vsub.f32 %v60, %v349
    %v367 = vsub.f32 %v61, %v350
    %v368 = vsub.f32 %v62, %v351
    %v369 = vsub.f32 %v63, %v352
    %v370 = vsub.f32 %v64, %v353
    %v371 = vsub.f32 %v65, %v354
    %v372 = vsub.f32 %v66, %v355
    %v373 = vsub.f32 %v67, %v356
    %v374 = vsub.f32 %v68, %v357
    %v375 = vsub.f32 %v69, %v358
    %v376 = vsub.f32 %v70, %v359
    %v377 = vsub.f32 %v71, %v360
    %v378 = vsub.f32 %v72, %v361
    %v379 = vsub.f32 %v73, %v362
    %v380 = vsub.f32 %v74, %v363
    %v381 = vmul.f32 %v364, %v364
    %v382 = vmul.f32 %v365, %v365
    %v383 = vmul.f32 %v366, %v366
    %v384 = vmul.f32 %v367, %v367
    %v385 = vmul.f32 %v368, %v368
    %v386 = vmul.f32 %v369, %v369
    %v387 = vmul.f32 %v370, %v370
    %v388 = vmul.f32 %v371, %v371
    %v389 = vmul.f32 %v372, %v372
    %v390 = vmul.f32 %v373, %v373
    %v391 = vmul.f32 %v374, %v374
    %v392 = vmul.f32 %v375, %v375
    %v393 = vmul.f32 %v376, %v376
    %v394 = vmul.f32 %v377, %v377
    %v395 = vmul.f32 %v378, %v378
    %v396 = vmul.f32 %v379, %v379
    %v397 = vmul.f32 %v380, %v380
    %398 = vset.pattern.permute.xlu0 2
    %399 = vperm.xlu0 %398, %v92
    %v400 = vpop.permute.xlu0 %399
    %v402 = vmul.f32 %v381, %v400
    %v403 = vmul.f32 %v382, %v400
    %v404 = vmul.f32 %v383, %v400
    %v405 = vmul.f32 %v384, %v400
    %v406 = vmul.f32 %v385, %v400
    %v407 = vmul.f32 %v386, %v400
    %v408 = vmul.f32 %v387, %v400
    %v409 = vmul.f32 %v388, %v400
    %v410 = vmul.f32 %v389, %v400
    %v411 = vmul.f32 %v390, %v400
    %v412 = vmul.f32 %v391, %v400
    %v413 = vmul.f32 %v392, %v400
    %v414 = vmul.f32 %v393, %v400
    %v415 = vmul.f32 %v394, %v400
    %v416 = vmul.f32 %v395, %v400
    %v417 = vmul.f32 %v396, %v400
    %v418 = vmul.f32 %v397, %v400
    %v419 = vmax.f32 %v402, 1e-12
    %v420 = vmax.f32 %v403, 1e-12
    %v421 = vmax.f32 %v404, 1e-12
    %v422 = vmax.f32 %v405, 1e-12
    %v423 = vmax.f32 %v406, 1e-12
    %v424 = vmax.f32 %v407, 1e-12
    %v425 = vmax.f32 %v408, 1e-12
    %v426 = vmax.f32 %v409, 1e-12
    %v427 = vmax.f32 %v410, 1e-12
    %v428 = vmax.f32 %v411, 1e-12
    %v429 = vmax.f32 %v412, 1e-12
    %v430 = vmax.f32 %v413, 1e-12
    %v431 = vmax.f32 %v414, 1e-12
    %v432 = vmax.f32 %v415, 1e-12
    %v433 = vmax.f32 %v416, 1e-12
    %v434 = vmax.f32 %v417, 1e-12
    %v435 = vmax.f32 %v418, 1e-12
    %v436 = vmin.f32 %v419, 1e+12
    %v437 = vmin.f32 %v420, 1e+12
    %v438 = vmin.f32 %v421, 1e+12
    %v439 = vmin.f32 %v422, 1e+12
    %v440 = vmin.f32 %v423, 1e+12
    %v441 = vmin.f32 %v424, 1e+12
    %v442 = vmin.f32 %v425, 1e+12
    %v443 = vmin.f32 %v426, 1e+12
    %v444 = vmin.f32 %v427, 1e+12
    %v445 = vmin.f32 %v428, 1e+12
    %v446 = vmin.f32 %v429, 1e+12
    %v447 = vmin.f32 %v430, 1e+12
    %v448 = vmin.f32 %v431, 1e+12
    %v449 = vmin.f32 %v432, 1e+12
    %v450 = vmin.f32 %v433, 1e+12
    %v451 = vmin.f32 %v434, 1e+12
    %v452 = vmin.f32 %v435, 1e+12
    %v453 = vadd.f32 %v436, %v437
    %v454 = vadd.f32 %v453, %v438
    %v455 = vadd.f32 %v454, %v439
    %v456 = vadd.f32 %v455, %v440
    %v457 = vadd.f32 %v456, %v441
    %v458 = vadd.f32 %v457, %v442
    %v459 = vadd.f32 %v458, %v443
    %v460 = vadd.f32 %v459, %v444
    %v461 = vadd.f32 %v460, %v445
    %v462 = vadd.f32 %v461, %v446
    %v463 = vadd.f32 %v462, %v447
    %v464 = vadd.f32 %v463, %v448
    %v465 = vadd.f32 %v464, %v449
    %v466 = vadd.f32 %v465, %v450
    %v467 = vadd.f32 %v466, %v451
    %v468 = vsel %vm215, %v452, 0.0
    %v469 = vadd.f32 %v467, %v468
    %470 = vadd.xlane.f32.xlu0 %v469
    %v471 = vpop.xlane.xlu0 %470
    %v472 = vadd.f32 %v346, %v471
    %v473 = vperm.slane %v75, 3
    %v474 = vperm.slane %v76, 3
    %v475 = vperm.slane %v77, 3
    %v476 = vperm.slane %v78, 3
    %v477 = vperm.slane %v79, 3
    %v478 = vperm.slane %v80, 3
    %v479 = vperm.slane %v81, 3
    %v480 = vperm.slane %v82, 3
    %v481 = vperm.slane %v83, 3
    %v482 = vperm.slane %v84, 3
    %v483 = vperm.slane %v85, 3
    %v484 = vperm.slane %v86, 3
    %v485 = vperm.slane %v87, 3
    %v486 = vperm.slane %v88, 3
    %v487 = vperm.slane %v89, 3
    %v488 = vperm.slane %v90, 3
    %v489 = vperm.slane %v91, 3
    %v490 = vsub.f32 %v58, %v473
    %v491 = vsub.f32 %v59, %v474
    %v492 = vsub.f32 %v60, %v475
    %v493 = vsub.f32 %v61, %v476
    %v494 = vsub.f32 %v62, %v477
    %v495 = vsub.f32 %v63, %v478
    %v496 = vsub.f32 %v64, %v479
    %v497 = vsub.f32 %v65, %v480
    %v498 = vsub.f32 %v66, %v481
    %v499 = vsub.f32 %v67, %v482
    %v500 = vsub.f32 %v68, %v483
    %v501 = vsub.f32 %v69, %v484
    %v502 = vsub.f32 %v70, %v485
    %v503 = vsub.f32 %v71, %v486
    %v504 = vsub.f32 %v72, %v487
    %v505 = vsub.f32 %v73, %v488
    %v506 = vsub.f32 %v74, %v489
    %v507 = vmul.f32 %v490, %v490
    %v508 = vmul.f32 %v491, %v491
    %v509 = vmul.f32 %v492, %v492
    %v510 = vmul.f32 %v493, %v493
    %v511 = vmul.f32 %v494, %v494
    %v512 = vmul.f32 %v495, %v495
    %v513 = vmul.f32 %v496, %v496
    %v514 = vmul.f32 %v497, %v497
    %v515 = vmul.f32 %v498, %v498
    %v516 = vmul.f32 %v499, %v499
    %v517 = vmul.f32 %v500, %v500
    %v518 = vmul.f32 %v501, %v501
    %v519 = vmul.f32 %v502, %v502
    %v520 = vmul.f32 %v503, %v503
    %v521 = vmul.f32 %v504, %v504
    %v522 = vmul.f32 %v505, %v505
    %v523 = vmul.f32 %v506, %v506
    %524 = vset.pattern.permute.xlu0 3
    %525 = vperm.xlu0 %524, %v92
    %v526 = vpop.permute.xlu0 %525
    %v528 = vmul.f32 %v507, %v526
    %v529 = vmul.f32 %v508, %v526
    %v530 = vmul.f32 %v509, %v526
    %v531 = vmul.f32 %v510, %v526
    %v532 = vmul.f32 %v511, %v526
    %v533 = vmul.f32 %v512, %v526
    %v534 = vmul.f32 %v513, %v526
    %v535 = vmul.f32 %v514, %v526
    %v536 = vmul.f32 %v515, %v526
    %v537 = vmul.f32 %v516, %v526
    %v538 = vmul.f32 %v517, %v526
    %v539 = vmul.f32 %v518, %v526
    %v540 = vmul.f32 %v519, %v526
    %v541 = vmul.f32 %v520, %v526
    %v542 = vmul.f32 %v521, %v526
    %v543 = vmul.f32 %v522, %v526
    %v544 = vmul.f32 %v523, %v526
    %v545 = vmax.f32 %v528, 1e-12
    %v546 = vmax.f32 %v529, 1e-12
    %v547 = vmax.f32 %v530, 1e-12
    %v548 = vmax.f32 %v531, 1e-12
    %v549 = vmax.f32 %v532, 1e-12
    %v550 = vmax.f32 %v533, 1e-12
    %v551 = vmax.f32 %v534, 1e-12
    %v552 = vmax.f32 %v535, 1e-12
    %v553 = vmax.f32 %v536, 1e-12
    %v554 = vmax.f32 %v537, 1e-12
    %v555 = vmax.f32 %v538, 1e-12
    %v556 = vmax.f32 %v539, 1e-12
    %v557 = vmax.f32 %v540, 1e-12
    %v558 = vmax.f32 %v541, 1e-12
    %v559 = vmax.f32 %v542, 1e-12
    %v560 = vmax.f32 %v543, 1e-12
    %v561 = vmax.f32 %v544, 1e-12
    %v562 = vmin.f32 %v545, 1e+12
    %v563 = vmin.f32 %v546, 1e+12
    %v564 = vmin.f32 %v547, 1e+12
    %v565 = vmin.f32 %v548, 1e+12
    %v566 = vmin.f32 %v549, 1e+12
    %v567 = vmin.f32 %v550, 1e+12
    %v568 = vmin.f32 %v551, 1e+12
    %v569 = vmin.f32 %v552, 1e+12
    %v570 = vmin.f32 %v553, 1e+12
    %v571 = vmin.f32 %v554, 1e+12
    %v572 = vmin.f32 %v555, 1e+12
    %v573 = vmin.f32 %v556, 1e+12
    %v574 = vmin.f32 %v557, 1e+12
    %v575 = vmin.f32 %v558, 1e+12
    %v576 = vmin.f32 %v559, 1e+12
    %v577 = vmin.f32 %v560, 1e+12
    %v578 = vmin.f32 %v561, 1e+12
    %v579 = vadd.f32 %v562, %v563
    %v580 = vadd.f32 %v579, %v564
    %v581 = vadd.f32 %v580, %v565
    %v582 = vadd.f32 %v581, %v566
    %v583 = vadd.f32 %v582, %v567
    %v584 = vadd.f32 %v583, %v568
    %v585 = vadd.f32 %v584, %v569
    %v586 = vadd.f32 %v585, %v570
    %v587 = vadd.f32 %v586, %v571
    %v588 = vadd.f32 %v587, %v572
    %v589 = vadd.f32 %v588, %v573
    %v590 = vadd.f32 %v589, %v574
    %v591 = vadd.f32 %v590, %v575
    %v592 = vadd.f32 %v591, %v576
    %v593 = vadd.f32 %v592, %v577
    %v594 = vsel %vm215, %v578, 0.0
    %v595 = vadd.f32 %v593, %v594
    %596 = vadd.xlane.f32.xlu0 %v595
    %v597 = vpop.xlane.xlu0 %596
    %v598 = vadd.f32 %v472, %v597
    %v599 = vperm.slane %v75, 4
    %v600 = vperm.slane %v76, 4
    %v601 = vperm.slane %v77, 4
    %v602 = vperm.slane %v78, 4
    %v603 = vperm.slane %v79, 4
    %v604 = vperm.slane %v80, 4
    %v605 = vperm.slane %v81, 4
    %v606 = vperm.slane %v82, 4
    %v607 = vperm.slane %v83, 4
    %v608 = vperm.slane %v84, 4
    %v609 = vperm.slane %v85, 4
    %v610 = vperm.slane %v86, 4
    %v611 = vperm.slane %v87, 4
    %v612 = vperm.slane %v88, 4
    %v613 = vperm.slane %v89, 4
    %v614 = vperm.slane %v90, 4
    %v615 = vperm.slane %v91, 4
    %v616 = vsub.f32 %v58, %v599
    %v617 = vsub.f32 %v59, %v600
    %v618 = vsub.f32 %v60, %v601
    %v619 = vsub.f32 %v61, %v602
    %v620 = vsub.f32 %v62, %v603
    %v621 = vsub.f32 %v63, %v604
    %v622 = vsub.f32 %v64, %v605
    %v623 = vsub.f32 %v65, %v606
    %v624 = vsub.f32 %v66, %v607
    %v625 = vsub.f32 %v67, %v608
    %v626 = vsub.f32 %v68, %v609
    %v627 = vsub.f32 %v69, %v610
    %v628 = vsub.f32 %v70, %v611
    %v629 = vsub.f32 %v71, %v612
    %v630 = vsub.f32 %v72, %v613
    %v631 = vsub.f32 %v73, %v614
    %v632 = vsub.f32 %v74, %v615
    %v633 = vmul.f32 %v616, %v616
    %v634 = vmul.f32 %v617, %v617
    %v635 = vmul.f32 %v618, %v618
    %v636 = vmul.f32 %v619, %v619
    %v637 = vmul.f32 %v620, %v620
    %v638 = vmul.f32 %v621, %v621
    %v639 = vmul.f32 %v622, %v622
    %v640 = vmul.f32 %v623, %v623
    %v641 = vmul.f32 %v624, %v624
    %v642 = vmul.f32 %v625, %v625
    %v643 = vmul.f32 %v626, %v626
    %v644 = vmul.f32 %v627, %v627
    %v645 = vmul.f32 %v628, %v628
    %v646 = vmul.f32 %v629, %v629
    %v647 = vmul.f32 %v630, %v630
    %v648 = vmul.f32 %v631, %v631
    %v649 = vmul.f32 %v632, %v632
    %650 = vset.pattern.permute.xlu0 4
    %651 = vperm.xlu0 %650, %v92
    %v652 = vpop.permute.xlu0 %651
    %v654 = vmul.f32 %v633, %v652
    %v655 = vmul.f32 %v634, %v652
    %v656 = vmul.f32 %v635, %v652
    %v657 = vmul.f32 %v636, %v652
    %v658 = vmul.f32 %v637, %v652
    %v659 = vmul.f32 %v638, %v652
    %v660 = vmul.f32 %v639, %v652
    %v661 = vmul.f32 %v640, %v652
    %v662 = vmul.f32 %v641, %v652
    %v663 = vmul.f32 %v642, %v652
    %v664 = vmul.f32 %v643, %v652
    %v665 = vmul.f32 %v644, %v652
    %v666 = vmul.f32 %v645, %v652
    %v667 = vmul.f32 %v646, %v652
    %v668 = vmul.f32 %v647, %v652
    %v669 = vmul.f32 %v648, %v652
    %v670 = vmul.f32 %v649, %v652
    %v671 = vmax.f32 %v654, 1e-12
    %v672 = vmax.f32 %v655, 1e-12
    %v673 = vmax.f32 %v656, 1e-12
    %v674 = vmax.f32 %v657, 1e-12
    %v675 = vmax.f32 %v658, 1e-12
    %v676 = vmax.f32 %v659, 1e-12
    %v677 = vmax.f32 %v660, 1e-12
    %v678 = vmax.f32 %v661, 1e-12
    %v679 = vmax.f32 %v662, 1e-12
    %v680 = vmax.f32 %v663, 1e-12
    %v681 = vmax.f32 %v664, 1e-12
    %v682 = vmax.f32 %v665, 1e-12
    %v683 = vmax.f32 %v666, 1e-12
    %v684 = vmax.f32 %v667, 1e-12
    %v685 = vmax.f32 %v668, 1e-12
    %v686 = vmax.f32 %v669, 1e-12
    %v687 = vmax.f32 %v670, 1e-12
    %v688 = vmin.f32 %v671, 1e+12
    %v689 = vmin.f32 %v672, 1e+12
    %v690 = vmin.f32 %v673, 1e+12
    %v691 = vmin.f32 %v674, 1e+12
    %v692 = vmin.f32 %v675, 1e+12
    %v693 = vmin.f32 %v676, 1e+12
    %v694 = vmin.f32 %v677, 1e+12
    %v695 = vmin.f32 %v678, 1e+12
    %v696 = vmin.f32 %v679, 1e+12
    %v697 = vmin.f32 %v680, 1e+12
    %v698 = vmin.f32 %v681, 1e+12
    %v699 = vmin.f32 %v682, 1e+12
    %v700 = vmin.f32 %v683, 1e+12
    %v701 = vmin.f32 %v684, 1e+12
    %v702 = vmin.f32 %v685, 1e+12
    %v703 = vmin.f32 %v686, 1e+12
    %v704 = vmin.f32 %v687, 1e+12
    %v705 = vadd.f32 %v688, %v689
    %v706 = vadd.f32 %v705, %v690
    %v707 = vadd.f32 %v706, %v691
    %v708 = vadd.f32 %v707, %v692
    %v709 = vadd.f32 %v708, %v693
    %v710 = vadd.f32 %v709, %v694
    %v711 = vadd.f32 %v710, %v695
    %v712 = vadd.f32 %v711, %v696
    %v713 = vadd.f32 %v712, %v697
    %v714 = vadd.f32 %v713, %v698
    %v715 = vadd.f32 %v714, %v699
    %v716 = vadd.f32 %v715, %v700
    %v717 = vadd.f32 %v716, %v701
    %v718 = vadd.f32 %v717, %v702
    %v719 = vadd.f32 %v718, %v703
    %v720 = vsel %vm215, %v704, 0.0
    %v721 = vadd.f32 %v719, %v720
    %722 = vadd.xlane.f32.xlu0 %v721
    %v723 = vpop.xlane.xlu0 %722
    %v724 = vadd.f32 %v598, %v723
    %v725 = vperm.slane %v75, 5
    %v726 = vperm.slane %v76, 5
    %v727 = vperm.slane %v77, 5
    %v728 = vperm.slane %v78, 5
    %v729 = vperm.slane %v79, 5
    %v730 = vperm.slane %v80, 5
    %v731 = vperm.slane %v81, 5
    %v732 = vperm.slane %v82, 5
    %v733 = vperm.slane %v83, 5
    %v734 = vperm.slane %v84, 5
    %v735 = vperm.slane %v85, 5
    %v736 = vperm.slane %v86, 5
    %v737 = vperm.slane %v87, 5
    %v738 = vperm.slane %v88, 5
    %v739 = vperm.slane %v89, 5
    %v740 = vperm.slane %v90, 5
    %v741 = vperm.slane %v91, 5
    %v742 = vsub.f32 %v58, %v725
    %v743 = vsub.f32 %v59, %v726
    %v744 = vsub.f32 %v60, %v727
    %v745 = vsub.f32 %v61, %v728
    %v746 = vsub.f32 %v62, %v729
    %v747 = vsub.f32 %v63, %v730
    %v748 = vsub.f32 %v64, %v731
    %v749 = vsub.f32 %v65, %v732
    %v750 = vsub.f32 %v66, %v733
    %v751 = vsub.f32 %v67, %v734
    %v752 = vsub.f32 %v68, %v735
    %v753 = vsub.f32 %v69, %v736
    %v754 = vsub.f32 %v70, %v737
    %v755 = vsub.f32 %v71, %v738
    %v756 = vsub.f32 %v72, %v739
    %v757 = vsub.f32 %v73, %v740
    %v758 = vsub.f32 %v74, %v741
    %v759 = vmul.f32 %v742, %v742
    %v760 = vmul.f32 %v743, %v743
    %v761 = vmul.f32 %v744, %v744
    %v762 = vmul.f32 %v745, %v745
    %v763 = vmul.f32 %v746, %v746
    %v764 = vmul.f32 %v747, %v747
    %v765 = vmul.f32 %v748, %v748
    %v766 = vmul.f32 %v749, %v749
    %v767 = vmul.f32 %v750, %v750
    %v768 = vmul.f32 %v751, %v751
    %v769 = vmul.f32 %v752, %v752
    %v770 = vmul.f32 %v753, %v753
    %v771 = vmul.f32 %v754, %v754
    %v772 = vmul.f32 %v755, %v755
    %v773 = vmul.f32 %v756, %v756
    %v774 = vmul.f32 %v757, %v757
    %v775 = vmul.f32 %v758, %v758
    %776 = vset.pattern.permute.xlu0 5
    %777 = vperm.xlu0 %776, %v92
    %v778 = vpop.permute.xlu0 %777
    %v780 = vmul.f32 %v759, %v778
    %v781 = vmul.f32 %v760, %v778
    %v782 = vmul.f32 %v761, %v778
    %v783 = vmul.f32 %v762, %v778
    %v784 = vmul.f32 %v763, %v778
    %v785 = vmul.f32 %v764, %v778
    %v786 = vmul.f32 %v765, %v778
    %v787 = vmul.f32 %v766, %v778
    %v788 = vmul.f32 %v767, %v778
    %v789 = vmul.f32 %v768, %v778
    %v790 = vmul.f32 %v769, %v778
    %v791 = vmul.f32 %v770, %v778
    %v792 = vmul.f32 %v771, %v778
    %v793 = vmul.f32 %v772, %v778
    %v794 = vmul.f32 %v773, %v778
    %v795 = vmul.f32 %v774, %v778
    %v796 = vmul.f32 %v775, %v778
    %v797 = vmax.f32 %v780, 1e-12
    %v798 = vmax.f32 %v781, 1e-12
    %v799 = vmax.f32 %v782, 1e-12
    %v800 = vmax.f32 %v783, 1e-12
    %v801 = vmax.f32 %v784, 1e-12
    %v802 = vmax.f32 %v785, 1e-12
    %v803 = vmax.f32 %v786, 1e-12
    %v804 = vmax.f32 %v787, 1e-12
    %v805 = vmax.f32 %v788, 1e-12
    %v806 = vmax.f32 %v789, 1e-12
    %v807 = vmax.f32 %v790, 1e-12
    %v808 = vmax.f32 %v791, 1e-12
    %v809 = vmax.f32 %v792, 1e-12
    %v810 = vmax.f32 %v793, 1e-12
    %v811 = vmax.f32 %v794, 1e-12
    %v812 = vmax.f32 %v795, 1e-12
    %v813 = vmax.f32 %v796, 1e-12
    %v814 = vmin.f32 %v797, 1e+12
    %v815 = vmin.f32 %v798, 1e+12
    %v816 = vmin.f32 %v799, 1e+12
    %v817 = vmin.f32 %v800, 1e+12
    %v818 = vmin.f32 %v801, 1e+12
    %v819 = vmin.f32 %v802, 1e+12
    %v820 = vmin.f32 %v803, 1e+12
    %v821 = vmin.f32 %v804, 1e+12
    %v822 = vmin.f32 %v805, 1e+12
    %v823 = vmin.f32 %v806, 1e+12
    %v824 = vmin.f32 %v807, 1e+12
    %v825 = vmin.f32 %v808, 1e+12
    %v826 = vmin.f32 %v809, 1e+12
    %v827 = vmin.f32 %v810, 1e+12
    %v828 = vmin.f32 %v811, 1e+12
    %v829 = vmin.f32 %v812, 1e+12
    %v830 = vmin.f32 %v813, 1e+12
    %v831 = vadd.f32 %v814, %v815
    %v832 = vadd.f32 %v831, %v816
    %v833 = vadd.f32 %v832, %v817
    %v834 = vadd.f32 %v833, %v818
    %v835 = vadd.f32 %v834, %v819
    %v836 = vadd.f32 %v835, %v820
    %v837 = vadd.f32 %v836, %v821
    %v838 = vadd.f32 %v837, %v822
    %v839 = vadd.f32 %v838, %v823
    %v840 = vadd.f32 %v839, %v824
    %v841 = vadd.f32 %v840, %v825
    %v842 = vadd.f32 %v841, %v826
    %v843 = vadd.f32 %v842, %v827
    %v844 = vadd.f32 %v843, %v828
    %v845 = vadd.f32 %v844, %v829
    %v846 = vsel %vm215, %v830, 0.0
    %v847 = vadd.f32 %v845, %v846
    %848 = vadd.xlane.f32.xlu0 %v847
    %v849 = vpop.xlane.xlu0 %848
    %v850 = vadd.f32 %v724, %v849
    %v851 = vmul.f32 %v850, 0.00047709924
    %vm852 = vcmask 7168
    %853 = vst.msk [vmem:[%s4] sm:$0xff] %vm852, %v851
    %v854 = vrot.slane %v851, 4
    %v855 = vadd.f32 %v851, %v854
    %v856 = vrot.slane %v855, 2
    %v857 = vadd.f32 %v855, %v856
    %v858 = vrot.slane %v857, 1
    %v859 = vadd.f32 %v857, %v858
    %v860 = vmul.f32 %v859, 0.125
    %vm861 = vcmask 0
    %862 = vst.msk [vmem:[#allocation8] sm:$0x1] %vm861, %v860
    // Predicated region
    $region26: #{center_loss_forward.1} parent=1 // pred_check
      _
    $region27: #{center_loss_forward.1} parent=1 // pred_check_branch
      %864 = sbr.rel (0) target = $region29
    $region28: #{center_loss_forward.1} parent=1 // pred_region
      %866 = vsyncadd [#allocation4], 0
      %s868 = sshll.u32 [#allocation8], 4
      %s869 = int_to_ptr.vmem [resolvable:$true] %s868
      %s870 = sshll.u32 %s3, 4
      %s871 = int_to_ptr.hbm [resolvable:$true] %s870
      %873 = dma.vmem_to_hbm [thread:$0]  %s869, 16, %s871, [#allocation4]
    $region29: #{center_loss_forward.1} parent=1 // pred_fallthru
      _
    // Predicated region
    $region30: #{center_loss_forward.1} parent=1 // pred_check
      _
    $region31: #{center_loss_forward.1} parent=1 // pred_check_branch
      %875 = sbr.rel (0) target = $region33
    $region32: #{center_loss_forward.1} parent=1 // pred_region
      _
    $region33: #{center_loss_forward.1} parent=1 // pred_fallthru
      _
    // Predicated region
    $region34: #{center_loss_forward.1} parent=1 // pred_check
      _
    $region35: #{center_loss_forward.1} parent=1 // pred_check_branch
      %877 = sbr.rel (0) target = $region37
    $region36: #{center_loss_forward.1} parent=1 // pred_region
      %879 = dma.done [#allocation4], 16
    $region37: #{center_loss_forward.1} parent=1 // pred_fallthru
      _
    // Predicated region
    $region38: #{center_loss_forward.1} parent=1 // pred_check
      _
    $region39: #{center_loss_forward.1} parent=1 // pred_check_branch
      %881 = sbr.rel (0) target = $region41
    $region40: #{center_loss_forward.1} parent=1 // pred_region
      _
    $region41: #{center_loss_forward.1} parent=1 // pred_fallthru
      _
    %882 = vsyncpa [#allocation3], 1
    %883 = vsyncpa [#allocation6], 1
    %884 = vsyncpa [#allocation4], 1

</llo_original>
